<compile_context>
chip_gen: v7x
topology: tpu7x:2x2x1
jax: 0.10.0
libtpu: 0.0.40
codegen_flags: <defaults>
</compile_context>

<pallas_src>
import functools

import jax
import jax.numpy as jnp
from jax.experimental import pallas as pl
from jax.experimental.pallas import tpu as pltpu

EPS_GN = 1e-5   # torch.nn.GroupNorm default eps
EPS_LN = 1e-5   # torch.nn.LayerNorm default eps


# ---------------------------------------------------------------------------
# Backend-adaptive knobs
# ---------------------------------------------------------------------------
def _compute_dtype():
    """MXU operand dtype: bf16 on TPU (f32 accumulation), f32 elsewhere so the
    kernel also runs under CPU/interpret execution."""
    return jnp.bfloat16 if jax.default_backend() == "tpu" else jnp.float32


def _vmem_limit_bytes():
    """Scoped-VMEM budget with headroom for compiler scratch/spill.
    v7x (64 MiB/TC) -> ~56 MiB, v5e/v6e (128 MiB) -> ~110 MiB."""
    cap = 128 * 1024 * 1024
    if jax.default_backend() == "tpu":
        try:
            info = pltpu.get_tpu_info()
            cap = int(getattr(info, "vmem_capacity_bytes", cap))
        except Exception:
            pass
    cap = max(cap, 32 * 1024 * 1024)
    return int(min(cap - 8 * 1024 * 1024, 110 * 1024 * 1024))


_BUFFERED1_OK = None


def _const_block_kwargs():
    """pipeline_mode=pl.Buffered(1) for blocks whose index never changes across
    the inner grid axis (resident weights / stats / cross K-V): halves their
    VMEM footprint vs. default double-buffering.  Probed once; skipped off-TPU
    or on toolchains that reject single-buffering."""
    global _BUFFERED1_OK
    if _BUFFERED1_OK is None:
        if jax.default_backend() != "tpu" or not hasattr(pl, "Buffered"):
            _BUFFERED1_OK = False
        else:
            def _probe(x_ref, w_ref, o_ref):
                o_ref[...] = x_ref[...] + w_ref[...]
            try:
                out = pl.pallas_call(
                    _probe,
                    out_shape=jax.ShapeDtypeStruct((16, 128), jnp.float32),
                    grid=(2,),
                    in_specs=[pl.BlockSpec((8, 128), lambda i: (i, 0)),
                              pl.BlockSpec((8, 128), lambda i: (0, 0),
                                           pipeline_mode=pl.Buffered(1))],
                    out_specs=pl.BlockSpec((8, 128), lambda i: (i, 0)),
                )(jnp.zeros((16, 128), jnp.float32),
                  jnp.zeros((8, 128), jnp.float32))
                jax.block_until_ready(out)
                _BUFFERED1_OK = True
            except Exception:
                _BUFFERED1_OK = False
    return {"pipeline_mode": pl.Buffered(1)} if _BUFFERED1_OK else {}


# ---------------------------------------------------------------------------
# Tiling heuristics
# ---------------------------------------------------------------------------
def _pick_ff_chunks(Cff):
    """Number of Cff chunks for the MLP: chunk width must stay a multiple of
    128 so the wf2 lane slices remain aligned."""
    for n in (4, 2):
        if Cff % n == 0 and (Cff // n) % 128 == 0:
            return n
    return 1


def _pick_frame_block(B, F, HW, C, Cff, Sc, num_heads, itemsize, ff_chunks,
                      budget):
    """Frames per grid step, derived from an explicit per-step VMEM budget.
    Block legality: the (1, C, TB*HW) last dim must be a multiple of 128 or
    the full S axis."""
    weight_bytes = itemsize * (6 * C * C + 2 * C * Cff) + 4 * (12 * C + Cff)
    kv_bytes = 2 * itemsize * C * Sc            # per-batch cross K/V blocks
    logits_bytes = 4 * num_heads * HW * HW      # one frame's self-attn logits

    def fits(tb):
        chunk = tb * HW
        act = 16 * C * chunk                    # in + out f32 blocks, 2x-buffered
        act += itemsize * C * chunk             # ctx VMEM scratch
        act += 4 * C * chunk                    # hid (f32)
        act += 4 * itemsize * C * chunk         # q/k/v + normed activation
        act += 4 * (Cff // ff_chunks) * chunk   # one FF chunk (f32)
        return weight_bytes + kv_bytes + logits_bytes + act <= budget

    cands = [tb for tb in range(1, F + 1)
             if F % tb == 0 and ((tb * HW) % 128 == 0 or tb == F)]
    feasible = [tb for tb in cands if fits(tb)]
    if not feasible:
        return min(cands)                       # best effort: smallest legal block
    tb = max(feasible)
    # v6e/v7x MXUs are 2x256^2: prefer 256-aligned token tiles when close.
    aligned = [t for t in feasible if (t * HW) % 256 == 0]
    if aligned and 2 * max(aligned) >= tb:
        tb = max(aligned)
    # keep >= 2 grid steps when possible so v7x's two TensorCores both work
    if B == 1 and tb == F:
        smaller = [t for t in feasible if t < F]
        if smaller:
            tb = max(smaller)
    return tb


def _pick_stats_chunk(S, C, budget_bytes=32 * 1024 * 1024):
    """Lane chunk for the GroupNorm-stats streaming reduce: large (>=512 lanes
    when possible), decoupled from the transformer tile."""
    best = None
    d = 128
    while d <= S:
        if S % d == 0 and 8 * C * d <= budget_bytes:
            best = d
        d += 128
    return best if best is not None else S


# ---------------------------------------------------------------------------
# Kernel 1: per-channel sum / sum-of-squares for GroupNorm, tiled over S
# ---------------------------------------------------------------------------
def _gn_channel_stats_kernel(x_ref, o_ref, acc_ref):
    step = pl.program_id(1)

    @pl.when(step == 0)
    def _():
        acc_ref[...] = jnp.zeros_like(acc_ref)

    x = x_ref[0].astype(jnp.float32)                         # (C, chunk)
    s1 = jnp.sum(x, axis=1, keepdims=True)
    s2 = jnp.sum(x * x, axis=1, keepdims=True)
    acc_ref[...] = acc_ref[...] + jnp.concatenate([s1, s2], axis=1)

    @pl.when(step == pl.num_programs(1) - 1)
    def _():
        o_ref[0] = acc_ref[...]                              # (C, 2)


def _finalize_group_stats(ch_stats, num_groups, count):
    """Tiny per-group combine of the (B, C, 2) channel sums -> per-channel
    (mean, rstd). O(B*C) work, done in plain JAX."""
    B, C, _ = ch_stats.shape
    cpg = C // num_groups
    s1 = ch_stats[..., 0].reshape(B, num_groups, cpg).sum(axis=-1)
    s2 = ch_stats[..., 1].reshape(B, num_groups, cpg).sum(axis=-1)
    mean = s1 / count
    var = s2 / count - mean * mean
    rstd = jax.lax.rsqrt(var + EPS_GN)
    mean_c = jnp.repeat(mean, cpg, axis=1)                   # (B, C)
    rstd_c = jnp.repeat(rstd, cpg, axis=1)
    return jnp.stack([mean_c, rstd_c], axis=-1).astype(jnp.float32)


# ---------------------------------------------------------------------------
# Kernel 2: fused GroupNorm-apply + transformer block + residual.
# Activations are kept channel-major (C, T) with T = TB*H*W tokens on lanes,
# so blocks come straight out of the contiguous NCFHW layout.
# ---------------------------------------------------------------------------
def _temporal_block_kernel(
    x_ref, stats_ref, k2_ref, v2_ref,
    gng_ref, gnb_ref,
    ln1g_ref, ln1b_ref, wq1_ref, wk1_ref, wv1_ref, wo1_ref, bo1_ref,
    ln2g_ref, ln2b_ref, wq2_ref, wo2_ref, bo2_ref,
    ln3g_ref, ln3b_ref, wf1_ref, bf1_ref, wf2_ref, bf2_ref,
    o_ref, ctx_ref, *,
    num_heads, head_dim, frames, hw, ff_chunks, compute_dtype):

    cdt = compute_dtype
    x_cm = x_ref[0].astype(jnp.float32)                      # (C, T) channel-major
    C, _ = x_cm.shape
    scale = 1.0 / (head_dim ** 0.5)

    # GroupNorm normalisation (stats accumulated by kernel 1).
    mean = stats_ref[0][:, 0:1]                              # (C, 1)
    rstd = stats_ref[0][:, 1:2]
    hid = (x_cm - mean) * rstd * gng_ref[...] + gnb_ref[...]

    def layer_norm(v, g_ref, b_ref):                         # norm over channels (f32)
        mu = jnp.mean(v, axis=0, keepdims=True)
        var = jnp.mean((v - mu) ** 2, axis=0, keepdims=True)
        return (v - mu) * jax.lax.rsqrt(var + EPS_LN) * g_ref[...] + b_ref[...]

    def softmax_lastdim(logits):                             # f32; EUP reciprocal
        logits = logits - jnp.max(logits, axis=-1, keepdims=True)
        p = jnp.exp(logits)
        return p * pl.reciprocal(jnp.sum(p, axis=-1, keepdims=True), approx=True)

    def attend(q_cm, k_cm, v_cm):
        # (C, T) -> (heads, head_dim, T): leading-dim split only (head_dim is a
        # multiple of the 8-row sublane tile).  Einsum orders are chosen so the
        # dot_general outputs are already in the desired layout: no swapaxes.
        tq, tk = q_cm.shape[1], k_cm.shape[1]
        qh = q_cm.reshape(num_heads, head_dim, tq)
        kh = k_cm.reshape(num_heads, head_dim, tk)
        vh = v_cm.reshape(num_heads, head_dim, tk)
        logits = jnp.einsum("hdq,hdk->hqk", qh, kh,
                            preferred_element_type=jnp.float32)
        p = softmax_lastdim(logits).astype(cdt)
        ctx = jnp.einsum("hdk,hqk->hdq", vh, p,
                         preferred_element_type=jnp.float32)
        return ctx.reshape(C, tq)                            # channel-major context

    # 1) per-frame spatial self-attention (TB frames batched per grid step;
    #    projections see the full TB*HW token tile, softmax/PV loop per frame)
    n1 = layer_norm(hid, ln1g_ref, ln1b_ref).astype(cdt)
    q1 = (jnp.dot(wq1_ref[...], n1, preferred_element_type=jnp.float32)
          * scale).astype(cdt)
    k1 = jnp.dot(wk1_ref[...], n1, preferred_element_type=jnp.float32).astype(cdt)
    v1 = jnp.dot(wv1_ref[...], n1, preferred_element_type=jnp.float32).astype(cdt)
    if frames == 1:
        ctx1 = attend(q1, k1, v1).astype(cdt)
    else:
        for s in range(frames):
            sl = slice(s * hw, (s + 1) * hw)
            ctx_ref[:, sl] = attend(q1[:, sl], k1[:, sl], v1[:, sl]).astype(cdt)
        ctx1 = ctx_ref[...]
    hid = hid + (jnp.dot(wo1_ref[...], ctx1, preferred_element_type=jnp.float32)
                 + bo1_ref[...])

    # 2) cross-attention on the conditioning sequence; K/V were precomputed per
    #    batch in the wrapper (they only depend on b, not on the token tile)
    n2 = layer_norm(hid, ln2g_ref, ln2b_ref).astype(cdt)
    q2 = (jnp.dot(wq2_ref[...], n2, preferred_element_type=jnp.float32)
          * scale).astype(cdt)
    ctx2 = attend(q2, k2_ref[0], v2_ref[0]).astype(cdt)
    hid = hid + (jnp.dot(wo2_ref[...], ctx2, preferred_element_type=jnp.float32)
                 + bo2_ref[...])

    # 3) feed-forward, tiled over Cff so the (Cff, T) f32 intermediate never
    #    materializes in full.
    n3 = layer_norm(hid, ln3g_ref, ln3b_ref).astype(cdt)
    Cff = wf1_ref.shape[0]
    csz = Cff // ff_chunks
    ff = None
    for c in range(ff_chunks):
        rs = slice(c * csz, (c + 1) * csz)
        h1 = (jnp.dot(wf1_ref[rs, :], n3, preferred_element_type=jnp.float32)
              + bf1_ref[rs, :])
        h1 = jax.nn.gelu(h1).astype(cdt)
        part = jnp.dot(wf2_ref[:, rs], h1, preferred_element_type=jnp.float32)
        ff = part if ff is None else ff + part
    hid = hid + ff + bf2_ref[...]

    # outer residual of TemporalAttentionLayer, still in the N C (F*HW) layout
    o_ref[0] = (hid + x_cm).astype(o_ref.dtype)


# ---------------------------------------------------------------------------
# Parameter preparation: weights transposed for channel-major dots (+ cast to
# the matmul dtype), vectors as (C, 1) columns broadcast over the lane axis.
# ---------------------------------------------------------------------------
def _prepare_params(params, cdt):
    t = lambda w: jnp.asarray(w, jnp.float32).T.astype(cdt)
    col = lambda v: jnp.asarray(v, jnp.float32).reshape(-1, 1)
    return {
        "gn_g": col(params["gn_g"]), "gn_b": col(params["gn_b"]),
        "ln1_g": col(params["ln1_g"]), "ln1_b": col(params["ln1_b"]),
        "wq1": t(params["wq1"]), "wk1": t(params["wk1"]), "wv1": t(params["wv1"]),
        "wo1": t(params["wo1"]), "bo1": col(params["bo1"]),
        "ln2_g": col(params["ln2_g"]), "ln2_b": col(params["ln2_b"]),
        "wq2": t(params["wq2"]), "wo2": t(params["wo2"]), "bo2": col(params["bo2"]),
        "ln3_g": col(params["ln3_g"]), "ln3_b": col(params["ln3_b"]),
        "wf1": t(params["wf1"]), "bf1": col(params["bf1"]),
        "wf2": t(params["wf2"]), "bf2": col(params["bf2"]),
    }


def _cost_estimate(B, C, F, HW, Sc, Cff, TB, itemsize):
    steps = B * (F // TB)
    T = TB * HW
    flops = steps * (
        2 * T * C * C * 6          # self q/k/v/o + cross q/o projections
        + 2 * T * HW * C * 2       # self-attn logits + PV
        + 2 * T * Sc * C * 2       # cross-attn logits + PV
        + 2 * T * C * Cff * 2)     # MLP
    transcendentals = steps * (T * (HW + Sc + Cff))
    weight_bytes = itemsize * (6 * C * C + 2 * C * Cff) + 4 * (12 * C + Cff)
    bytes_accessed = steps * (2 * 4 * C * T + 2 * itemsize * C * Sc + weight_bytes)
    return pl.CostEstimate(flops=int(flops),
                           transcendentals=int(transcendentals),
                           bytes_accessed=int(bytes_accessed))


# ---------------------------------------------------------------------------
# TemporalAttentionLayer.forward
# ---------------------------------------------------------------------------
def temporal_attention_layer(x, cond, params, *, num_groups, num_heads, head_dim):
    B, C, F, H, W = x.shape
    HW = H * W
    S = F * HW
    Sc, Dc = cond.shape[1], cond.shape[2]
    assert C % num_groups == 0 and C == num_heads * head_dim

    cdt = _compute_dtype()
    itemsize = jnp.dtype(cdt).itemsize
    p = _prepare_params(params, cdt)
    Cff = p["wf1"].shape[0]

    vmem_limit = _vmem_limit_bytes()
    ff_chunks = _pick_ff_chunks(Cff)
    TB = _pick_frame_block(B, F, HW, C, Cff, Sc, num_heads, itemsize, ff_chunks,
                           budget=vmem_limit)
    chunk = TB * HW
    nblk = F // TB

    x3 = x.reshape(B, C, S)        # contiguous: free reshape, no HBM transpose

    # --- kernel 1: GroupNorm channel sums, tiled over S (accumulator + when) ---
    stats_chunk = _pick_stats_chunk(S, C)
    nstat = S // stats_chunk
    ch_stats = pl.pallas_call(
        _gn_channel_stats_kernel,
        out_shape=jax.ShapeDtypeStruct((B, C, 2), jnp.float32),
        grid=(B, nstat),
        in_specs=[pl.BlockSpec((1, C, stats_chunk), lambda b, s: (b, 0, s))],
        out_specs=pl.BlockSpec((1, C, 2), lambda b, s: (b, 0, 0)),
        scratch_shapes=[pltpu.VMEM((C, 2), jnp.float32)],
        compiler_params=pltpu.CompilerParams(
            dimension_semantics=("parallel", "arbitrary")),
    )(x3)
    gn_stats = _finalize_group_stats(ch_stats, num_groups,
                                     float((C // num_groups) * S))

    # --- cross-attention K/V hoisted out of the grid (depend only on b) --------
    cond_f = cond.astype(jnp.float32)
    k2 = jnp.einsum("bsd,dc->bcs", cond_f,
                    jnp.asarray(params["wk2"], jnp.float32)).astype(cdt)
    v2 = jnp.einsum("bsd,dc->bcs", cond_f,
                    jnp.asarray(params["wv2"], jnp.float32)).astype(cdt)

    # --- kernel 2: fused GN-apply + transformer block + residual ---------------
    kernel = functools.partial(
        _temporal_block_kernel,
        num_heads=num_heads, head_dim=head_dim, frames=TB, hw=HW,
        ff_chunks=ff_chunks, compute_dtype=cdt)

    ckw = _const_block_kwargs()

    def w_spec(shape):                       # grid-invariant weight blocks
        return pl.BlockSpec(shape, lambda b, s: (0,) * len(shape), **ckw)

    def b_spec(shape):                       # per-batch blocks, constant across s
        return pl.BlockSpec(shape, lambda b, s: (b, 0, 0), **ckw)

    in_specs = [
        pl.BlockSpec((1, C, chunk), lambda b, s: (b, 0, s)),
        b_spec((1, C, 2)),
        b_spec((1, C, Sc)),
        b_spec((1, C, Sc)),
        w_spec((C, 1)), w_spec((C, 1)),
        w_spec((C, 1)), w_spec((C, 1)),
        w_spec((C, C)), w_spec((C, C)), w_spec((C, C)), w_spec((C, C)),
        w_spec((C, 1)),
        w_spec((C, 1)), w_spec((C, 1)),
        w_spec((C, C)), w_spec((C, C)), w_spec((C, 1)),
        w_spec((C, 1)), w_spec((C, 1)),
        w_spec((Cff, C)), w_spec((Cff, 1)), w_spec((C, Cff)), w_spec((C, 1)),
    ]
    args = (
        x3, gn_stats, k2, v2,
        p["gn_g"], p["gn_b"],
        p["ln1_g"], p["ln1_b"], p["wq1"], p["wk1"], p["wv1"], p["wo1"], p["bo1"],
        p["ln2_g"], p["ln2_b"], p["wq2"], p["wo2"], p["bo2"],
        p["ln3_g"], p["ln3_b"], p["wf1"], p["bf1"], p["wf2"], p["bf2"],
    )
    out3 = pl.pallas_call(
        kernel,
        out_shape=jax.ShapeDtypeStruct((B, C, S), x.dtype),
        grid=(B, nblk),
        in_specs=in_specs,
        out_specs=pl.BlockSpec((1, C, chunk), lambda b, s: (b, 0, s)),
        scratch_shapes=[pltpu.VMEM((C, chunk), cdt)],
        compiler_params=pltpu.CompilerParams(
            dimension_semantics=("parallel", "parallel"),
            vmem_limit_bytes=vmem_limit),
        cost_estimate=_cost_estimate(B, C, F, HW, Sc, Cff, TB, itemsize),
    )(*args)
    return out3.reshape(B, C, F, H, W)


def diffusion_decoder_forward(x, timesteps, condition, params,
                              *, num_groups, num_heads, head_dim):
    # TODO(synk): the full UNet3DConditionModel backbone (conv_in, ResNet3D
    # down/up blocks, timestep-embedding MLP) and the pretrained AutoencoderKL
    # VAE are not reproducible from this source; only the custom
    # TemporalAttentionLayer defined in this file is implemented.
    # TODO(synk): the diffusers feed-forward is GEGLU; a plain GELU MLP is used.
    del timesteps
    return temporal_attention_layer(x, condition, params,
                                    num_groups=num_groups,
                                    num_heads=num_heads, head_dim=head_dim)


# ---------------------------------------------------------------------------
# Deterministic parameter initialization (torch-style layouts)
# ---------------------------------------------------------------------------
def init_params(key, channels, cond_dim, ff_mult=4):
    Cff = channels * ff_mult
    keys = jax.random.split(key, 16)
    n = lambda k, shape, s=0.05: (s * jax.random.normal(k, shape)).astype(jnp.float32)
    return {
        "gn_g": jnp.ones((channels, 1), jnp.float32),
        "gn_b": jnp.zeros((channels, 1), jnp.float32),
        "ln1_g": jnp.ones((1, channels), jnp.float32),
        "ln1_b": jnp.zeros((1, channels), jnp.float32),
        "wq1": n(keys[0], (channels, channels)),
        "wk1": n(keys[1], (channels, channels)),
        "wv1": n(keys[2], (channels, channels)),
        "wo1": n(keys[3], (channels, channels)),
        "bo1": jnp.zeros((1, channels), jnp.float32),
        "ln2_g": jnp.ones((1, channels), jnp.float32),
        "ln2_b": jnp.zeros((1, channels), jnp.float32),
        "wq2": n(keys[4], (channels, channels)),
        "wk2": n(keys[5], (cond_dim, channels)),
        "wv2": n(keys[6], (cond_dim, channels)),
        "wo2": n(keys[7], (channels, channels)),
        "bo2": jnp.zeros((1, channels), jnp.float32),
        "ln3_g": jnp.ones((1, channels), jnp.float32),
        "ln3_b": jnp.zeros((1, channels), jnp.float32),
        "wf1": n(keys[8], (channels, Cff)),
        "bf1": jnp.zeros((1, Cff), jnp.float32),
        "wf2": n(keys[9], (Cff, channels)),
        "bf2": jnp.zeros((1, channels), jnp.float32),
    }


if __name__ == "__main__":
    # Small synthetic shapes consistent with the module: hidden states NCFHW,
    # attention_head_dim=8, GroupNorm groups=32, cross_attention_dim=cond dim.
    B, C, F, H, W = 2, 32, 4, 8, 8
    COND_DIM, COND_SEQ = 64, 8
    HEAD_DIM = 8
    NUM_HEADS = C // HEAD_DIM
    NUM_GROUPS = 32

    key = jax.random.PRNGKey(0)
    kx, kc, kp = jax.random.split(key, 3)

    x = jax.random.normal(kx, (B, C, F, H, W), dtype=jnp.float32)
    timesteps = jnp.arange(B, dtype=jnp.int32)
    condition = jax.random.normal(kc, (B, COND_SEQ, COND_DIM), dtype=jnp.float32)
    params = init_params(kp, C, COND_DIM)

    out = diffusion_decoder_forward(x, timesteps, condition, params,
                                    num_groups=NUM_GROUPS,
                                    num_heads=NUM_HEADS, head_dim=HEAD_DIM)
    out = jax.block_until_ready(out)
    assert out.shape == (B, C, F, H, W) and out.dtype == jnp.float32
    print("KERNEL_OK")
</pallas_src>

<mosaic_0001>
module attributes {stable_mosaic.version = 11 : i64} {
  func.func @_gn_channel_stats_kernel(%arg0: i32, %arg1: i32, %arg2: memref<1x32x256xf32, #tpu.memory_space<vmem>>, %arg3: memref<1x32x2xf32, #tpu.memory_space<vmem>>, %arg4: memref<32x2xf32, #tpu.memory_space<vmem>>) attributes {dimension_semantics = [#tpu.dimension_semantics<parallel>, #tpu.dimension_semantics<arbitrary>], iteration_bounds = array<i64: 2, 1>, scalar_prefetch = 0 : i64, scratch_operands = 1 : i64, tpu.core_type = #tpu.core_type<tc>, window_params = [{transform_indices = @transform_0, window_bounds = array<i64: 1, 32, 256>}, {transform_indices = @transform_1, window_bounds = array<i64: 1, 32, 2>}]} {
    %c0_i32 = arith.constant 0 : i32
    %0 = arith.cmpi eq, %arg1, %c0_i32 : i32
    %1 = arith.extui %0 : i1 to i32
    %c0_i32_0 = arith.constant 0 : i32
    %2 = arith.cmpi ne, %1, %c0_i32_0 : i32
    scf.if %2 {
      %cst_10 = arith.constant 0.000000e+00 : f32
      %17 = vector.broadcast %cst_10 : f32 to vector<32x2xf32>
      %c0_11 = arith.constant 0 : index
      %c0_12 = arith.constant 0 : index
      %18 = vector.load %arg4[%c0_11, %c0_12] : memref<32x2xf32, #tpu.memory_space<vmem>>, vector<32x2xf32>
      tpu.vector_store %arg4[%c0_11, %c0_12], %17 {strides = array<i32>} : memref<32x2xf32, #tpu.memory_space<vmem>>, vector<32x2xf32>,
    } else {
    }
    %c0 = arith.constant 0 : index
    %c0_1 = arith.constant 0 : index
    %c0_2 = arith.constant 0 : index
    %3 = vector.load %arg2[%c0, %c0_1, %c0_2] : memref<1x32x256xf32, #tpu.memory_space<vmem>>, vector<1x32x256xf32>
    %4 = vector.shape_cast %3 : vector<1x32x256xf32> to vector<32x256xf32>
    %cst = arith.constant dense<0.000000e+00> : vector<32xf32>
    %5 = vector.multi_reduction <add>, %4, %cst [1] : vector<32x256xf32> to vector<32xf32>
    %6 = vector.shape_cast %5 : vector<32xf32> to vector<32x1xf32>
    %7 = arith.mulf %4, %4 : vector<32x256xf32>
    %cst_3 = arith.constant dense<0.000000e+00> : vector<32xf32>
    %8 = vector.multi_reduction <add>, %7, %cst_3 [1] : vector<32x256xf32> to vector<32xf32>
    %9 = vector.shape_cast %8 : vector<32xf32> to vector<32x1xf32>
    %c0_4 = arith.constant 0 : index
    %c0_5 = arith.constant 0 : index
    %10 = vector.load %arg4[%c0_4, %c0_5] : memref<32x2xf32, #tpu.memory_space<vmem>>, vector<32x2xf32>
    %11 = tpu.concatenate %6, %9 in 1 : vector<32x1xf32>, vector<32x1xf32> -> vector<32x2xf32>
    %12 = arith.addf %10, %11 : vector<32x2xf32>
    %c0_6 = arith.constant 0 : index
    %c0_7 = arith.constant 0 : index
    %13 = vector.load %arg4[%c0_6, %c0_7] : memref<32x2xf32, #tpu.memory_space<vmem>>, vector<32x2xf32>
    tpu.vector_store %arg4[%c0_6, %c0_7], %12 {strides = array<i32>} : memref<32x2xf32, #tpu.memory_space<vmem>>, vector<32x2xf32>,
    %c0_i32_8 = arith.constant 0 : i32
    %14 = arith.cmpi eq, %arg1, %c0_i32_8 : i32
    %15 = arith.extui %14 : i1 to i32
    %c0_i32_9 = arith.constant 0 : i32
    %16 = arith.cmpi ne, %15, %c0_i32_9 : i32
    scf.if %16 {
      %c0_10 = arith.constant 0 : index
      %c0_11 = arith.constant 0 : index
      %17 = vector.load %arg4[%c0_10, %c0_11] : memref<32x2xf32, #tpu.memory_space<vmem>>, vector<32x2xf32>
      %c0_12 = arith.constant 0 : index
      %c0_13 = arith.constant 0 : index
      %c0_14 = arith.constant 0 : index
      %18 = vector.load %arg3[%c0_12, %c0_13, %c0_14] : memref<1x32x2xf32, #tpu.memory_space<vmem>>, vector<1x32x2xf32>
      %19 = vector.shape_cast %18 : vector<1x32x2xf32> to vector<32x2xf32>
      %20 = vector.shape_cast %17 : vector<32x2xf32> to vector<1x32x2xf32>
      tpu.vector_store %arg3[%c0_12, %c0_13, %c0_14], %20 {strides = array<i32>} : memref<1x32x2xf32, #tpu.memory_space<vmem>>, vector<1x32x2xf32>,
    } else {
    }
    return
  }
  func.func @transform_0(%arg0: i32, %arg1: i32) -> (i32, i32, i32) {
    %c0_i32 = arith.constant 0 : i32
    %c0_i32_0 = arith.constant 0 : i32
    return %arg0, %c0_i32, %arg1 : i32, i32, i32
  }
  func.func @transform_1(%arg0: i32, %arg1: i32) -> (i32, i32, i32) {
    %c0_i32 = arith.constant 0 : i32
    %c0_i32_0 = arith.constant 0 : i32
    %c0_i32_1 = arith.constant 0 : i32
    return %arg0, %c0_i32, %c0_i32_0 : i32, i32, i32
  }
}

</mosaic_0001>

<llo_original>
// kernel: tpu_custom_call.1
$region0: #{tpu_custom_call.1}
  #allocation0 [shape = 'u32[]', space=smem, size = 0x4, offset = 0x4, fixed_abs, tag = 'smem constant byte address 0x4 - core index']
  #allocation1 [shape = 'u32[144,128]{1,0:T(1,128)}', space=vmem, size = 0x12000, scoped, tag = 'internal scratch']
  #allocation2 [shape = 'f32[32,2]{1,0:T(8,128)}', space=vmem, size = 0x4000, scoped, tag = 'scratch operand']
  %s0 = inlined_call_operand.hbm [shape: f32[2,32,256], index: 0, kind: input, shape index: {}]
  %s1 = inlined_call_operand.vmem [shape: f32[2,32,2], index: 1, kind: output, shape index: {}]
  %s2 = sld [smem:[#allocation0]]
  $region49: #{tpu_custom_call.1} parent=0
    _
  %s4 = ssub.s32 1, %s2
  %s5 = scalar_select 0, %s4, %s2
  $region1: #{tpu_custom_call.1} parent=0
    #allocation3 [shape = 'u8[65536]{0}', space=vmem, size = 0x10000, scoped, tag = 'input window, operand 0']
    #allocation4 [shape = 's32[2]{0}', space=sflag, size = 0x8, scoped, tag = 'scoped memory for tpu_custom_call.1']
    %6 = vsyncpa [#allocation4], 0
    %s7 = scalar_lea.sflag [#allocation4], 1
    %8 = vsyncpa %s7, 0
    loop: start=0, step=1, limit=4
    $region2: #{tpu_custom_call.1} parent=1 // loop_pre_header
      _
    $region3: #{tpu_custom_call.1} parent=1 // loop_header
      %s10 = sphi 0, %s14
      %p11 = scmp.ge.s32.totalorder %s10, 4
      %s17 = sphi 0, %s29
      %s18 = sphi 0, %s25
      %s19 = sphi 0, %s17
      %s20 = sphi 0, %s18
      %s21 = sphi 0, %s19
      %s22 = sphi 0, %s20
      %s34 = sphi 0, %s36
      %s37 = sphi 0, %s34
      %s38 = sphi 0, %s37
      %s54 = sphi 0, %s38
      %s60 = sphi 0, %s62
      %s63 = sphi 0, %s60
      %s64 = sphi 0, %s63
      %s80 = sphi 0, %s64
    $region4: #{tpu_custom_call.1} parent=1 // loop_header_branch
      %13 = sbr.rel (%p11) target = $region8
    $region5: #{tpu_custom_call.1} parent=1 // loop_body
      %s15 = ssub.s32 %s10, 1
      %s16 = ssub.s32 %s10, 2
      %s23 = sadd.s32 1, %s18
      %p24 = scmp.ge.s32.totalorder %s23, 1
      %s25 = scalar_select %p24, 0, %s23
      %s26 = sadd.s32 1, %s17
      %s27 = scalar_select %p24, %s26, %s17
      %p28 = scmp.ge.s32.totalorder %s27, 2
      %s29 = scalar_select %p28, 0, %s27
      %s30 = ssub.s32 %s17, %s29
      %s31 = ssub.s32 %s18, %s25
      %s32 = sor.u32 %s30, %s31
      %p33 = scmp.eq.s32.totalorder %s32, 0
      %s35 = sadd.s32 %s34, 1
      %s36 = scalar_select %p33, %s34, %s35
      %p39 = pneg %p33
      %p40 = scmp.eq.s32.totalorder %s10, 1
      %p41 = por %p39, %p40
      %p42 = scmp.ne.s32.totalorder %s34, %s37
      %p43 = scmp.eq.s32.totalorder %s10, 0
      %p44 = por %p42, %p43
      %p45 = scmp.ne.s32.totalorder %s34, %s37
      %p46 = scmp.eq.s32.totalorder %s15, 1
      %p47 = por %p45, %p46
      %p48 = scmp.ne.s32.totalorder %s37, %s38
      %p49 = scmp.eq.s32.totalorder %s15, 0
      %p50 = por %p48, %p49
      %p51 = scmp.ne.s32.totalorder %s37, %s38
      %p52 = scmp.eq.s32.totalorder %s16, 1
      %p53 = por %p51, %p52
      %p55 = scmp.ne.s32.totalorder %s38, %s54
      %p56 = scmp.eq.s32.totalorder %s16, 0
      %p57 = por %p55, %p56
      %s58 = ssub.s32 %s17, %s29
      %p59 = scmp.eq.s32.totalorder %s58, 0
      %s61 = sadd.s32 %s60, 1
      %s62 = scalar_select %p59, %s60, %s61
      %p65 = pneg %p59
      %p66 = scmp.eq.s32.totalorder %s10, 1
      %p67 = por %p65, %p66
      %p68 = scmp.ne.s32.totalorder %s60, %s63
      %p69 = scmp.eq.s32.totalorder %s10, 0
      %p70 = por %p68, %p69
      %p71 = scmp.ne.s32.totalorder %s60, %s63
      %p72 = scmp.eq.s32.totalorder %s15, 1
      %p73 = por %p71, %p72
      %p74 = scmp.ne.s32.totalorder %s63, %s64
      %p75 = scmp.eq.s32.totalorder %s15, 0
      %p76 = por %p74, %p75
      %p77 = scmp.ne.s32.totalorder %s63, %s64
      %p78 = scmp.eq.s32.totalorder %s16, 1
      %p79 = por %p77, %p78
      %p81 = scmp.ne.s32.totalorder %s64, %s80
      %p82 = scmp.eq.s32.totalorder %s16, 0
      %p83 = por %p81, %p82
      %p84 = scmp.le.s32.totalorder 1, %s10
      %p85 = scmp.lt.s32.totalorder %s10, 3
      %p86 = pnand %p84, %p85
      %p87 = pneg %p86
      // Predicated region
      $region9: #{tpu_custom_call.1} parent=5 // pred_check
        _
      $region10: #{tpu_custom_call.1} parent=5 // pred_check_branch
        %89 = sbr.rel (%p86) target = $region12
      $region11: #{tpu_custom_call.1} parent=5 // pred_region
        %s90 = ssub.s32 %s10, 1
      $region12: #{tpu_custom_call.1} parent=5 // pred_fallthru
        _
      %p91 = scmp.lt.s32.totalorder %s10, 2
      // Predicated region
      $region13: #{tpu_custom_call.1} parent=5 // pred_check
        %p92 = pneg %p91
      $region14: #{tpu_custom_call.1} parent=5 // pred_check_branch
        %94 = sbr.rel (%p92) target = $region16
      $region15: #{tpu_custom_call.1} parent=5 // pred_region
        // Predicated region
        $region17: #{tpu_custom_call.1} parent=15 // pred_check
          %p95 = pneg %p44
        $region18: #{tpu_custom_call.1} parent=15 // pred_check_branch
          %97 = sbr.rel (%p95) target = $region20
        $region19: #{tpu_custom_call.1} parent=15 // pred_region
          %s98 = sand.u32 %s34, 1
          %s99 = scalar_lea.sflag [#allocation4], %s98
          %s100 = sand.u32 %s34, 1
          %s101 = smul.addr %s100, 64
          %s102 = scalar_lea.vmem [#allocation3], %s101
          %s103 = smul.u32 2, %s18
          %s105 = ssub.s32 1024, 1024
          %106 = vsyncadd %s99, %s105
          %s107 = smul.addr %s17, 8
          %s108 = sadd.s32 %s103, %s107
          %s109 = smul.addr %s108, 128
          %s110 = scalar_lea.hbm %s0, %s109
          %s111 = sshll.u32 %s102, 4
          %s112 = int_to_ptr.vmem [resolvable:$true] %s111
          %117 = dma.hbm_to_vmem [thread:$0]  %s110, 1024, %s112, %s99, 256, 256, 16
        $region20: #{tpu_custom_call.1} parent=15 // pred_fallthru
          _
      $region16: #{tpu_custom_call.1} parent=5 // pred_fallthru
        _
      %p118 = scmp.le.s32.totalorder 1, %s10
      %p119 = scmp.lt.s32.totalorder %s10, 3
      %p120 = pnand %p118, %p119
      %p121 = pneg %p120
      // Predicated region
      $region21: #{tpu_custom_call.1} parent=5 // pred_check
        _
      $region22: #{tpu_custom_call.1} parent=5 // pred_check_branch
        %123 = sbr.rel (%p120) target = $region24
      $region23: #{tpu_custom_call.1} parent=5 // pred_region
        %s124 = ssub.s32 %s10, 1
        %s125 = sand.u32 %s37, 1
        %s126 = scalar_lea.sflag [#allocation4], %s125
        %s127 = sand.u32 %s37, 1
        %s128 = smul.addr %s127, 64
        %s129 = scalar_lea.vmem [#allocation3], %s128
        // Predicated region
        $region25: #{tpu_custom_call.1} parent=23 // pred_check
          %p130 = pneg %p50
        $region26: #{tpu_custom_call.1} parent=23 // pred_check_branch
          %132 = sbr.rel (%p130) target = $region28
        $region27: #{tpu_custom_call.1} parent=23 // pred_region
          %133 = dma.done %s126, 1024
        $region28: #{tpu_custom_call.1} parent=23 // pred_fallthru
          _
        %s134 = sand.u32 %s37, 1
        %s135 = scalar_lea.sflag [#allocation4], %s134
        %s136 = sand.u32 %s37, 1
        %s137 = smul.addr %s136, 64
        %s138 = scalar_lea.vmem [#allocation3], %s137
        %p139 = pneg %p50
        %p140 = pneg %p47
        %p141 = pneg %p76
        %p142 = pneg %p73
        %p143 = scmp.lt.s32.totalorder %s19, 1
        %s144 = scalar_select %p143, %s19, 1
        %s145 = smul.addr %s144, 4
        %s146 = smul.addr %s145, 8
        %s147 = scalar_lea.vmem %s1, %s146
        %s148 = smul.u32 2, %s20
        %p149 = scmp.lt.s32.totalorder %s19, 1
        %s150 = scalar_select %p149, %s19, 1
        %s151 = smul.addr %s150, 4
        %s152 = smul.addr %s151, 8
        %s153 = scalar_lea.vmem %s1, %s152
        %p154 = scmp.eq.s32.totalorder %s20, 0
        // Predicated region
        $region29: #{tpu_custom_call.1} parent=23 // pred_check
          %p155 = pneg %p154
        $region30: #{tpu_custom_call.1} parent=23 // pred_check_branch
          %157 = sbr.rel (%p155) target = $region32
        $region31: #{tpu_custom_call.1} parent=23 // pred_region
          %vm158 = vcmask 15360
          %159 = vst.msk [vmem:[#allocation2] sm:$0xff] %vm158, 0.0
          %160 = vst.msk [vmem:[#allocation2 + $0x8] sm:$0xff] %vm158, 0.0
          %161 = vst.msk [vmem:[#allocation2 + $0x10] sm:$0xff] %vm158, 0.0
          %162 = vst.msk [vmem:[#allocation2 + $0x18] sm:$0xff] %vm158, 0.0
        $region32: #{tpu_custom_call.1} parent=23 // pred_fallthru
          _
        %v163 = vld [vmem:[%s129] sm:$0xff]
        %v164 = vld [vmem:[%s129 + $0x8] sm:$0xff]
        %v165 = vld [vmem:[%s129 + $0x10] sm:$0xff]
        %v166 = vld [vmem:[%s129 + $0x18] sm:$0xff]
        %v167 = vld [vmem:[%s129 + $0x20] sm:$0xff]
        %v168 = vld [vmem:[%s129 + $0x28] sm:$0xff]
        %v169 = vld [vmem:[%s129 + $0x30] sm:$0xff]
        %v170 = vld [vmem:[%s129 + $0x38] sm:$0xff]
        %v171 = vadd.f32 %v163, %v164
        %172 = vadd.xlane.f32.xlu0 %v171
        %v173 = vpop.xlane.xlu0 %172
        %v174 = vadd.f32 %v165, %v166
        %175 = vadd.xlane.f32.xlu0 %v174
        %v176 = vpop.xlane.xlu0 %175
        %v177 = vadd.f32 %v167, %v168
        %178 = vadd.xlane.f32.xlu0 %v177
        %v179 = vpop.xlane.xlu0 %178
        %v180 = vadd.f32 %v169, %v170
        %181 = vadd.xlane.f32.xlu0 %v180
        %v182 = vpop.xlane.xlu0 %181
        %v183 = vmul.f32 %v163, %v163
        %v184 = vmul.f32 %v164, %v164
        %v185 = vmul.f32 %v165, %v165
        %v186 = vmul.f32 %v166, %v166
        %v187 = vmul.f32 %v167, %v167
        %v188 = vmul.f32 %v168, %v168
        %v189 = vmul.f32 %v169, %v169
        %v190 = vmul.f32 %v170, %v170
        %v191 = vadd.f32 %v183, %v184
        %192 = vadd.xlane.f32.xlu0 %v191
        %v193 = vpop.xlane.xlu0 %192
        %v194 = vadd.f32 %v185, %v186
        %195 = vadd.xlane.f32.xlu0 %v194
        %v196 = vpop.xlane.xlu0 %195
        %v197 = vadd.f32 %v187, %v188
        %198 = vadd.xlane.f32.xlu0 %v197
        %v199 = vpop.xlane.xlu0 %198
        %v200 = vadd.f32 %v189, %v190
        %201 = vadd.xlane.f32.xlu0 %v200
        %v202 = vpop.xlane.xlu0 %201
        %v203 = vld [vmem:[#allocation2] sm:$0xff]
        %v204 = vld [vmem:[#allocation2 + $0x8] sm:$0xff]
        %v205 = vld [vmem:[#allocation2 + $0x10] sm:$0xff]
        %v206 = vld [vmem:[#allocation2 + $0x18] sm:$0xff]
        %vm207 = vcmask 7168
        %v208 = vsel %vm207, %v173, %v193
        %v209 = vsel %vm207, %v176, %v196
        %v210 = vsel %vm207, %v179, %v199
        %v211 = vsel %vm207, %v182, %v202
        %v212 = vadd.f32 %v203, %v208
        %v213 = vadd.f32 %v204, %v209
        %v214 = vadd.f32 %v205, %v210
        %v215 = vadd.f32 %v206, %v211
        %vm216 = vcmask 15360
        %217 = vst.msk [vmem:[#allocation2] sm:$0xff] %vm216, %v212
        %218 = vst.msk [vmem:[#allocation2 + $0x8] sm:$0xff] %vm216, %v213
        %219 = vst.msk [vmem:[#allocation2 + $0x10] sm:$0xff] %vm216, %v214
        %220 = vst.msk [vmem:[#allocation2 + $0x18] sm:$0xff] %vm216, %v215
        // Predicated region
        $region33: #{tpu_custom_call.1} parent=23 // pred_check
          %p221 = pneg %p154
        $region34: #{tpu_custom_call.1} parent=23 // pred_check_branch
          %223 = sbr.rel (%p221) target = $region36
        $region35: #{tpu_custom_call.1} parent=23 // pred_region
          %v224 = vld [vmem:[#allocation2] sm:$0xff]
          %v225 = vld [vmem:[#allocation2 + $0x8] sm:$0xff]
          %v226 = vld [vmem:[#allocation2 + $0x10] sm:$0xff]
          %v227 = vld [vmem:[#allocation2 + $0x18] sm:$0xff]
          %228 = vst.msk [vmem:[%s153] sm:$0xff] %vm216, %v224
          %229 = vst.msk [vmem:[%s153 + $0x8] sm:$0xff] %vm216, %v225
          %230 = vst.msk [vmem:[%s153 + $0x10] sm:$0xff] %vm216, %v226
          %231 = vst.msk [vmem:[%s153 + $0x18] sm:$0xff] %vm216, %v227
        $region36: #{tpu_custom_call.1} parent=23 // pred_fallthru
          _
        %p232 = scmp.lt.s32.totalorder %s19, 1
        %s233 = scalar_select %p232, %s19, 1
        %s234 = smul.addr %s233, 4
        %s235 = smul.addr %s234, 8
        %s236 = scalar_lea.vmem %s1, %s235
        // Predicated region
        $region37: #{tpu_custom_call.1} parent=23 // pred_check
          %p237 = pneg %p73
        $region38: #{tpu_custom_call.1} parent=23 // pred_check_branch
          %239 = sbr.rel (%p237) target = $region40
        $region39: #{tpu_custom_call.1} parent=23 // pred_region
          _
        $region40: #{tpu_custom_call.1} parent=23 // pred_fallthru
          _
      $region24: #{tpu_custom_call.1} parent=5 // pred_fallthru
        _
      %p240 = scmp.le.s32.totalorder 2, %s10
      // Predicated region
      $region41: #{tpu_custom_call.1} parent=5 // pred_check
        %p241 = pneg %p240
      $region42: #{tpu_custom_call.1} parent=5 // pred_check_branch
        %243 = sbr.rel (%p241) target = $region44
      $region43: #{tpu_custom_call.1} parent=5 // pred_region
        %s244 = ssub.s32 %s10, 2
        // Predicated region
        $region45: #{tpu_custom_call.1} parent=43 // pred_check
          %p245 = pneg %p79
        $region46: #{tpu_custom_call.1} parent=43 // pred_check_branch
          %247 = sbr.rel (%p245) target = $region48
        $region47: #{tpu_custom_call.1} parent=43 // pred_region
          %p248 = scmp.lt.s32.totalorder %s21, 1
          %s249 = scalar_select %p248, %s21, 1
          %s250 = smul.addr %s249, 4
          %s251 = smul.addr %s250, 8
          %s252 = scalar_lea.vmem %s1, %s251
        $region48: #{tpu_custom_call.1} parent=43 // pred_fallthru
          _
      $region44: #{tpu_custom_call.1} parent=5 // pred_fallthru
        _
    $region6: #{tpu_custom_call.1} parent=1 // loop_footer
      %s14 = sadd.s32 1, %s10
    $region7: #{tpu_custom_call.1} parent=1 // loop_footer_branch
      %9 = sbr.rel target = $region3
    $region8: #{tpu_custom_call.1} parent=1 // loop_exit
      _
    %253 = vsyncpa [#allocation4], 1
    %s254 = scalar_lea.sflag [#allocation4], 1
    %255 = vsyncpa %s254, 1

</llo_original>
